<compile_context>
chip_gen: v6e
topology: v6e:2x2x1
jax: 0.10.0
libtpu: 0.0.40
codegen_flags: <defaults>
</compile_context>

<pallas_src>
import functools
import math

import jax
import jax.numpy as jnp
from jax.experimental import pallas as pl
from jax.experimental.pallas import tpu as pltpu


def _round_up(n, m):
    return ((n + m - 1) // m) * m


def _router_kernel(x_ref, w1_ref, b1_ref, w2_ref, b2_ref, o_ref, *, matmul_dtype):
    x = x_ref[...]                                   # (TM, Ep)
    w1 = w1_ref[...]                                 # (Ep, Hp)  block-diagonal
    w2 = w2_ref[...]                                 # (Hp, Pp)  block-diagonal
    if matmul_dtype is not None:
        x = x.astype(matmul_dtype)
        w1 = w1.astype(matmul_dtype)
        w2 = w2.astype(matmul_dtype)

    # Linear1 + ReLU. MXU accumulates in f32; elementwise stays f32
    # (v5e VPU/EUP have no bf16 path).
    h = jnp.dot(x, w1, preferred_element_type=jnp.float32)          # (TM, Hp)
    h = jnp.maximum(h + b1_ref[...], 0.0)
    if matmul_dtype is not None:
        h = h.astype(matmul_dtype)

    # Linear2
    y = jnp.dot(h, w2, preferred_element_type=jnp.float32)          # (TM, Pp)
    y = y + b2_ref[...]

    # activateFunc: relu(tanh(y))
    o_ref[...] = jnp.maximum(jnp.tanh(y), 0.0).astype(o_ref.dtype)


def router_forward(x, w1, b1, w2, b2, *, block_rows=8192, matmul_dtype=jnp.bfloat16):
    """x: (..., embed_size) -> (..., num_out_path).

    w1: (embed_size, hid), b1: (hid,), w2: (hid, num_out_path), b2: (num_out_path,)
    block_rows: packed-row tile cap (sweep 4096/8192/16384; VMEM-limited).
    matmul_dtype: MXU operand dtype (default bf16, f32 accumulation).  The cast
      is done in-kernel AFTER the DMA, so it does not reduce HBM traffic; pass
      a bf16 `x` from the caller if you want to halve the x read as well.
    """
    lead = x.shape[:-1]
    E = x.shape[-1]
    H = w1.shape[1]
    P = w2.shape[1]
    M = 1
    for d in lead:
        M *= d

    # Lane-packing factor: fold R logical rows into the 128-lane axis.
    # (M, E) -> (M//R, R*E) is row-major contiguous, i.e. a free reshape.
    R = 4 if M % 4 == 0 else (2 if M % 2 == 0 else 1)
    rows = M // R
    Ep, Hp, Pp = E * R, H * R, P * R

    x2 = x.reshape(rows, Ep)
    if R == 1:
        w1p, w2p = w1, w2
    else:
        eye = jnp.eye(R, dtype=w1.dtype)
        w1p = jnp.kron(eye, w1)            # (R*E, R*H) block-diagonal
        w2p = jnp.kron(eye, w2)            # (R*H, R*P) block-diagonal
    b1p = jnp.tile(b1.reshape(1, H), (1, R))   # (1, R*H)
    b2p = jnp.tile(b2.reshape(1, P), (1, R))   # (1, R*P)

    # Row tile: multiple of 8 sublanes, capped by block_rows, balanced so big
    # problems get >= 2 grid steps (v7x has 2 TensorCores on the parallel axis).
    cap = max(8, (block_rows // 8) * 8)
    tm = min(cap, _round_up(pl.cdiv(rows, 2), 8))
    if tm >= rows:
        tm = rows                           # single full-extent block
    grid = (pl.cdiv(rows, tm),)             # last block may overhang (masked)

    vmem = pltpu.MemorySpace.VMEM
    isz = jnp.dtype(x.dtype).itemsize
    cost = pl.CostEstimate(
        flops=2 * rows * (Ep * Hp + Hp * Pp),
        transcendentals=rows * Pp,
        bytes_accessed=isz * rows * (Ep + Pp) + 4 * (Ep * Hp + Hp + Hp * Pp + Pp),
    )

    out = pl.pallas_call(
        functools.partial(_router_kernel, matmul_dtype=matmul_dtype),
        out_shape=jax.ShapeDtypeStruct((rows, Pp), x.dtype),
        grid=grid,
        in_specs=[
            pl.BlockSpec((tm, Ep), lambda i: (i, 0), memory_space=vmem),  # x: tiled over rows
            pl.BlockSpec((Ep, Hp), lambda i: (0, 0), memory_space=vmem),  # w1: resident
            pl.BlockSpec((1, Hp), lambda i: (0, 0), memory_space=vmem),   # b1: resident
            pl.BlockSpec((Hp, Pp), lambda i: (0, 0), memory_space=vmem),  # w2: resident
            pl.BlockSpec((1, Pp), lambda i: (0, 0), memory_space=vmem),   # b2: resident
        ],
        out_specs=pl.BlockSpec((tm, Pp), lambda i: (i, 0), memory_space=vmem),
        compiler_params=pltpu.CompilerParams(
            dimension_semantics=("parallel",),
            # tm=8192 packed rows ~= 16 MiB double-buffered working set:
            # above v5e's 16 MiB scoped default, well under v7x's 64 MiB physical.
            vmem_limit_bytes=48 * 1024 * 1024,
        ),
        cost_estimate=cost,
    )(x2, w1p, b1p, w2p, b2p)

    # (rows, R*P) unpacks to (M, P) with a free row-major reshape.
    return out.reshape(*lead, P)


def init_router_params(key, embed_size, hid, num_out_path, dtype=jnp.float32):
    """Deterministic synthetic init matching the module's parameter shapes.

    PyTorch Linear stores W as (out, in); here we keep (in, out) for the kernel.
    mlp[2].bias is filled with 1.5 per Router.init_weights().
    """
    k1, k2, k3 = jax.random.split(key, 3)
    bound1 = 1.0 / math.sqrt(embed_size)
    bound2 = 1.0 / math.sqrt(hid)
    w1 = jax.random.uniform(k1, (embed_size, hid), dtype, -bound1, bound1)
    b1 = jax.random.uniform(k2, (hid,), dtype, -bound1, bound1)
    w2 = jax.random.uniform(k3, (hid, num_out_path), dtype, -bound2, bound2)
    b2 = jnp.full((num_out_path,), 1.5, dtype)   # init_weights(): bias.fill_(1.5)
    return w1, b1, w2, b2


def _router_ref(x, w1, b1, w2, b2):
    h = jnp.maximum(x @ w1 + b1, 0.0)
    y = h @ w2 + b2
    return jnp.maximum(jnp.tanh(y), 0.0)


if __name__ == "__main__":
    embed_size, hid, num_out_path = 32, 32, 4
    key = jax.random.PRNGKey(0)
    kx, kp, kx2 = jax.random.split(key, 3)
    w1, b1, w2, b2 = init_router_params(kp, embed_size, hid, num_out_path)

    # Case 1: small (batch=2, seq=8) -> M=16, packed R=4 -> 4 rows, single tile.
    # Default bf16 MXU operands (looser tolerance).
    x = jax.random.normal(kx, (2, 8, embed_size), dtype=jnp.float32)
    ref = _router_ref(x, w1, b1, w2, b2)
    out = router_forward(x, w1, b1, w2, b2)
    jax.block_until_ready(out)
    assert out.shape == (2, 8, num_out_path)
    assert jnp.allclose(out, ref, atol=5e-2, rtol=5e-2), "bf16 packed path mismatch"

    # f32 MXU operands -> tight tolerance.
    out_f32 = router_forward(x, w1, b1, w2, b2, matmul_dtype=None)
    jax.block_until_ready(out_f32)
    assert jnp.allclose(out_f32, ref, atol=1e-5, rtol=1e-5), "f32 packed path mismatch"

    # Case 2: multi-tile grid with row overhang:
    # M=80 -> packed 20 rows, tile=8 -> 3 grid steps, last block partial (no jnp.pad).
    x_big = jax.random.normal(kx2, (5, 16, embed_size), dtype=jnp.float32)
    ref_big = _router_ref(x_big, w1, b1, w2, b2)
    out_big = router_forward(x_big, w1, b1, w2, b2, block_rows=8, matmul_dtype=None)
    jax.block_until_ready(out_big)
    assert out_big.shape == (5, 16, num_out_path)
    assert jnp.allclose(out_big, ref_big, atol=1e-5, rtol=1e-5), "overhang path mismatch"

    # Case 3: odd M=9 exercises the unpacked (R=1) fallback with overhang.
    x_odd = jax.random.normal(kx, (3, 3, embed_size), dtype=jnp.float32)
    ref_odd = _router_ref(x_odd, w1, b1, w2, b2)
    out_odd = router_forward(x_odd, w1, b1, w2, b2, matmul_dtype=None)
    jax.block_until_ready(out_odd)
    assert out_odd.shape == (3, 3, num_out_path)
    assert jnp.allclose(out_odd, ref_odd, atol=1e-5, rtol=1e-5), "R=1 fallback mismatch"

    print("KERNEL_OK")
</pallas_src>

<mosaic_0001>
module attributes {stable_mosaic.version = 11 : i64} {
  func.func @_router_kernel(%arg0: i32, %arg1: memref<4x128xf32, #tpu.memory_space<vmem>>, %arg2: memref<128x128xf32, #tpu.memory_space<vmem>>, %arg3: memref<1x128xf32, #tpu.memory_space<vmem>>, %arg4: memref<128x16xf32, #tpu.memory_space<vmem>>, %arg5: memref<1x16xf32, #tpu.memory_space<vmem>>, %arg6: memref<4x16xf32, #tpu.memory_space<vmem>>) attributes {dimension_semantics = [#tpu.dimension_semantics<parallel>], iteration_bounds = array<i64: 1>, scalar_prefetch = 0 : i64, scratch_operands = 0 : i64, tpu.core_type = #tpu.core_type<tc>, window_params = [{transform_indices = @transform_0, window_bounds = array<i64: 4, 128>}, {pipeline_mode = #tpu.pipeline_mode<synchronous>, transform_indices = @transform_1, window_bounds = array<i64: 128, 128>}, {pipeline_mode = #tpu.pipeline_mode<synchronous>, transform_indices = @transform_2, window_bounds = array<i64: 1, 128>}, {pipeline_mode = #tpu.pipeline_mode<synchronous>, transform_indices = @transform_3, window_bounds = array<i64: 128, 16>}, {pipeline_mode = #tpu.pipeline_mode<synchronous>, transform_indices = @transform_4, window_bounds = array<i64: 1, 16>}, {transform_indices = @transform_5, window_bounds = array<i64: 4, 16>}]} {
    %c0 = arith.constant 0 : index
    %c0_0 = arith.constant 0 : index
    %0 = vector.load %arg1[%c0, %c0_0] : memref<4x128xf32, #tpu.memory_space<vmem>>, vector<4x128xf32>
    %c0_1 = arith.constant 0 : index
    %c0_2 = arith.constant 0 : index
    %1 = vector.load %arg2[%c0_1, %c0_2] : memref<128x128xf32, #tpu.memory_space<vmem>>, vector<128x128xf32>
    %c0_3 = arith.constant 0 : index
    %c0_4 = arith.constant 0 : index
    %2 = vector.load %arg4[%c0_3, %c0_4] : memref<128x16xf32, #tpu.memory_space<vmem>>, vector<128x16xf32>
    %3 = arith.truncf %0 : vector<4x128xf32> to vector<4x128xbf16>
    %4 = arith.truncf %1 : vector<128x128xf32> to vector<128x128xbf16>
    %5 = arith.truncf %2 : vector<128x16xf32> to vector<128x16xbf16>
    %cst = arith.constant dense<0.000000e+00> : vector<4x128xf32>
    %6 = tpu.matmul %3, %4, %cst {dimension_numbers = #tpu.dot_dimension_numbers<[1], [0], [0], [1], [0, 0, 1, 1], [], []>} : vector<4x128xbf16>, vector<128x128xbf16>, vector<4x128xf32> -> vector<4x128xf32>
    %c0_5 = arith.constant 0 : index
    %c0_6 = arith.constant 0 : index
    %7 = vector.load %arg3[%c0_5, %c0_6] : memref<1x128xf32, #tpu.memory_space<vmem>>, vector<1x128xf32>
    %8 = vector.broadcast %7 : vector<1x128xf32> to vector<4x128xf32>
    %9 = arith.addf %6, %8 : vector<4x128xf32>
    %cst_7 = arith.constant 0.000000e+00 : f32
    %10 = vector.broadcast %cst_7 : f32 to vector<4x128xf32>
    %11 = arith.maximumf %9, %10 : vector<4x128xf32>
    %12 = arith.truncf %11 : vector<4x128xf32> to vector<4x128xbf16>
    %cst_8 = arith.constant dense<0.000000e+00> : vector<4x16xf32>
    %13 = tpu.matmul %12, %5, %cst_8 {dimension_numbers = #tpu.dot_dimension_numbers<[1], [0], [0], [1], [0, 0, 1, 1], [], []>} : vector<4x128xbf16>, vector<128x16xbf16>, vector<4x16xf32> -> vector<4x16xf32>
    %c0_9 = arith.constant 0 : index
    %c0_10 = arith.constant 0 : index
    %14 = vector.load %arg5[%c0_9, %c0_10] : memref<1x16xf32, #tpu.memory_space<vmem>>, vector<1x16xf32>
    %15 = vector.broadcast %14 : vector<1x16xf32> to vector<4x16xf32>
    %16 = arith.addf %13, %15 : vector<4x16xf32>
    %17 = math.tanh %16 : vector<4x16xf32>
    %cst_11 = arith.constant 0.000000e+00 : f32
    %18 = vector.broadcast %cst_11 : f32 to vector<4x16xf32>
    %19 = arith.maximumf %17, %18 : vector<4x16xf32>
    %c0_12 = arith.constant 0 : index
    %c0_13 = arith.constant 0 : index
    %20 = vector.load %arg6[%c0_12, %c0_13] : memref<4x16xf32, #tpu.memory_space<vmem>>, vector<4x16xf32>
    tpu.vector_store %arg6[%c0_12, %c0_13], %19 {strides = array<i32>} : memref<4x16xf32, #tpu.memory_space<vmem>>, vector<4x16xf32>,
    return
  }
  func.func @transform_0(%arg0: i32) -> (i32, i32) {
    %c0_i32 = arith.constant 0 : i32
    %c0_i32_0 = arith.constant 0 : i32
    return %arg0, %c0_i32 : i32, i32
  }
  func.func @transform_1(%arg0: i32) -> (i32, i32) {
    %c0_i32 = arith.constant 0 : i32
    %c0_i32_0 = arith.constant 0 : i32
    %c0_i32_1 = arith.constant 0 : i32
    return %c0_i32, %c0_i32_0 : i32, i32
  }
  func.func @transform_2(%arg0: i32) -> (i32, i32) {
    %c0_i32 = arith.constant 0 : i32
    %c0_i32_0 = arith.constant 0 : i32
    %c0_i32_1 = arith.constant 0 : i32
    return %c0_i32, %c0_i32_0 : i32, i32
  }
  func.func @transform_3(%arg0: i32) -> (i32, i32) {
    %c0_i32 = arith.constant 0 : i32
    %c0_i32_0 = arith.constant 0 : i32
    %c0_i32_1 = arith.constant 0 : i32
    return %c0_i32, %c0_i32_0 : i32, i32
  }
  func.func @transform_4(%arg0: i32) -> (i32, i32) {
    %c0_i32 = arith.constant 0 : i32
    %c0_i32_0 = arith.constant 0 : i32
    %c0_i32_1 = arith.constant 0 : i32
    return %c0_i32, %c0_i32_0 : i32, i32
  }
  func.func @transform_5(%arg0: i32) -> (i32, i32) {
    %c0_i32 = arith.constant 0 : i32
    %c0_i32_0 = arith.constant 0 : i32
    return %arg0, %c0_i32 : i32, i32
  }
}

</mosaic_0001>

<llo_original>
// kernel: tpu_custom_call.1
$region0: #{tpu_custom_call.1}
  #allocation0 [shape = 'u32[]', space=smem, size = 0x4, offset = 0x4, fixed_abs, tag = 'smem constant byte address 0x4 - core index']
  #allocation1 [shape = 'u32[144,128]{1,0:T(1,128)}', space=vmem, size = 0x12000, scoped, tag = 'internal scratch']
  %s0 = inlined_call_operand.vmem [shape: f32[4,128], index: 0, kind: input, shape index: {}]
  %s1 = inlined_call_operand.vmem [shape: f32[128,128], index: 1, kind: input, shape index: {}]
  %s2 = inlined_call_operand.vmem [shape: f32[1,128], index: 2, kind: input, shape index: {}]
  %s3 = inlined_call_operand.vmem [shape: f32[128,16], index: 3, kind: input, shape index: {}]
  %s4 = inlined_call_operand.vmem [shape: f32[1,16], index: 4, kind: input, shape index: {}]
  %s5 = inlined_call_operand.hbm [shape: f32[4,16], index: 5, kind: output, shape index: {}]
  %s6 = sld [smem:[#allocation0]]
  $region30: #{tpu_custom_call.1} parent=0
    _
  %s8 = ssub.s32 1, %s6
  %s9 = scalar_select 0, %s8, %s6
  $region1: #{tpu_custom_call.1} parent=0
    #allocation2 [shape = 'u8[2048]{0}', space=vmem, size = 0x800, scoped, tag = 'output window, operand 0, single buffered']
    #allocation3 [shape = 's32[1]{0}', space=sflag, size = 0x4, scoped, tag = 'scoped memory for tpu_custom_call.1']
    %10 = vsyncpa [#allocation3], 0
    // Predicated region
    $region2: #{tpu_custom_call.1} parent=1 // pred_check
      _
    $region3: #{tpu_custom_call.1} parent=1 // pred_check_branch
      %12 = sbr.rel (0) target = $region5
    $region4: #{tpu_custom_call.1} parent=1 // pred_region
      _
    $region5: #{tpu_custom_call.1} parent=1 // pred_fallthru
      _
    // Predicated region
    $region6: #{tpu_custom_call.1} parent=1 // pred_check
      _
    $region7: #{tpu_custom_call.1} parent=1 // pred_check_branch
      %14 = sbr.rel (0) target = $region9
    $region8: #{tpu_custom_call.1} parent=1 // pred_region
      _
    $region9: #{tpu_custom_call.1} parent=1 // pred_fallthru
      _
    // Predicated region
    $region10: #{tpu_custom_call.1} parent=1 // pred_check
      _
    $region11: #{tpu_custom_call.1} parent=1 // pred_check_branch
      %16 = sbr.rel (0) target = $region13
    $region12: #{tpu_custom_call.1} parent=1 // pred_region
      _
    $region13: #{tpu_custom_call.1} parent=1 // pred_fallthru
      _
    // Predicated region
    $region14: #{tpu_custom_call.1} parent=1 // pred_check
      _
    $region15: #{tpu_custom_call.1} parent=1 // pred_check_branch
      %18 = sbr.rel (0) target = $region17
    $region16: #{tpu_custom_call.1} parent=1 // pred_region
      _
    $region17: #{tpu_custom_call.1} parent=1 // pred_fallthru
      _
    // Predicated region
    $region18: #{tpu_custom_call.1} parent=1 // pred_check
      _
    $region19: #{tpu_custom_call.1} parent=1 // pred_check_branch
      %20 = sbr.rel (0) target = $region21
    $region20: #{tpu_custom_call.1} parent=1 // pred_region
      _
    $region21: #{tpu_custom_call.1} parent=1 // pred_fallthru
      _
    %v22 = vld [vmem:[%s0] sm:$0xf]
    %v23 = vld [vmem:[%s1] sm:$0xff]
    %v24 = vld [vmem:[%s1 + $0x8] sm:$0xff]
    %v25 = vld [vmem:[%s1 + $0x10] sm:$0xff]
    %v26 = vld [vmem:[%s1 + $0x18] sm:$0xff]
    %v27 = vld [vmem:[%s1 + $0x20] sm:$0xff]
    %v28 = vld [vmem:[%s1 + $0x28] sm:$0xff]
    %v29 = vld [vmem:[%s1 + $0x30] sm:$0xff]
    %v30 = vld [vmem:[%s1 + $0x38] sm:$0xff]
    %v31 = vld [vmem:[%s1 + $0x40] sm:$0xff]
    %v32 = vld [vmem:[%s1 + $0x48] sm:$0xff]
    %v33 = vld [vmem:[%s1 + $0x50] sm:$0xff]
    %v34 = vld [vmem:[%s1 + $0x58] sm:$0xff]
    %v35 = vld [vmem:[%s1 + $0x60] sm:$0xff]
    %v36 = vld [vmem:[%s1 + $0x68] sm:$0xff]
    %v37 = vld [vmem:[%s1 + $0x70] sm:$0xff]
    %v38 = vld [vmem:[%s1 + $0x78] sm:$0xff]
    %v39 = vld [vmem:[%s3] sm:$0xff]
    %v40 = vld [vmem:[%s3 + $0x8] sm:$0xff]
    %v41 = vld [vmem:[%s3 + $0x10] sm:$0xff]
    %v42 = vld [vmem:[%s3 + $0x18] sm:$0xff]
    %v43 = vld [vmem:[%s3 + $0x20] sm:$0xff]
    %v44 = vld [vmem:[%s3 + $0x28] sm:$0xff]
    %v45 = vld [vmem:[%s3 + $0x30] sm:$0xff]
    %v46 = vld [vmem:[%s3 + $0x38] sm:$0xff]
    %v47 = vld [vmem:[%s3 + $0x40] sm:$0xff]
    %v48 = vld [vmem:[%s3 + $0x48] sm:$0xff]
    %v49 = vld [vmem:[%s3 + $0x50] sm:$0xff]
    %v50 = vld [vmem:[%s3 + $0x58] sm:$0xff]
    %v51 = vld [vmem:[%s3 + $0x60] sm:$0xff]
    %v52 = vld [vmem:[%s3 + $0x68] sm:$0xff]
    %v53 = vld [vmem:[%s3 + $0x70] sm:$0xff]
    %v54 = vld [vmem:[%s3 + $0x78] sm:$0xff]
    %v55 = vpack.c.bf16 %v22, %v22
    %v56 = vpack.c.bf16 %v24, %v23
    %v57 = vpack.c.bf16 %v26, %v25
    %v58 = vpack.c.bf16 %v28, %v27
    %v59 = vpack.c.bf16 %v30, %v29
    %v60 = vpack.c.bf16 %v32, %v31
    %v61 = vpack.c.bf16 %v34, %v33
    %v62 = vpack.c.bf16 %v36, %v35
    %v63 = vpack.c.bf16 %v38, %v37
    %v64 = vpack.c.bf16 %v40, %v39
    %v65 = vpack.c.bf16 %v42, %v41
    %v66 = vpack.c.bf16 %v44, %v43
    %v67 = vpack.c.bf16 %v46, %v45
    %v68 = vpack.c.bf16 %v48, %v47
    %v69 = vpack.c.bf16 %v50, %v49
    %v70 = vpack.c.bf16 %v52, %v51
    %v71 = vpack.c.bf16 %v54, %v53
    %v72 = vld [vmem:[%s2] sm:$0x1]
    %v74 = vlaneseq
    %v75 = vshrl.u32 %v74, 7
    %v76 = vsub.s32 0, %v75
    %v77 = vrot.slane %v72, %v76
    %79 = vmatprep.subr.bf16.mxu0 0
    %80 = vmatpush1.bf16.msra.mxu0 %v63
    %81 = vmatprep.subr.bf16.mxu0 0
    %82 = vmatpush1.bf16.msra.mxu0 %v62
    %83 = vmatprep.subr.bf16.mxu0 0
    %84 = vmatpush1.bf16.msra.mxu0 %v61
    %85 = vmatprep.subr.bf16.mxu0 0
    %86 = vmatpush1.bf16.msra.mxu0 %v60
    %87 = vmatprep.subr.bf16.mxu0 0
    %88 = vmatpush1.bf16.msra.mxu0 %v59
    %89 = vmatprep.subr.bf16.mxu0 0
    %90 = vmatpush1.bf16.msra.mxu0 %v58
    %91 = vmatprep.subr.bf16.mxu0 0
    %92 = vmatpush1.bf16.msra.mxu0 %v57
    %93 = vmatprep.subr.bf16.mxu0 0
    %94 = vmatpush1.bf16.msra.mxu0 %v56
    %95 = vmatprep.subr.bf16.mxu0 0
    %96 = vmatpush2.bf16.msra.mxu0 0
    %97 = vmatprep.subr.bf16.mxu0 0
    %98 = vmatpush2.bf16.msra.mxu0 0
    %99 = vmatprep.subr.bf16.mxu0 0
    %100 = vmatpush2.bf16.msra.mxu0 0
    %101 = vmatprep.subr.bf16.mxu0 0
    %102 = vmatpush2.bf16.msra.mxu0 0
    %103 = vmatprep.subr.bf16.mxu0 0
    %104 = vmatpush2.bf16.msra.mxu0 0
    %105 = vmatprep.subr.bf16.mxu0 0
    %106 = vmatpush2.bf16.msra.mxu0 0
    %107 = vmatprep.subr.bf16.mxu0 0
    %108 = vmatpush2.bf16.msra.mxu0 0
    %109 = vmatprep.subr.bf16.mxu0 0
    %110 = vmatpush2.bf16.msra.mxu0 0
    %111 = vmatprep.mubr.bf16.mxu0 0
    %112 = vmatmul.mubr.bf16.gmra.mxu0 %v55
    %v113 = vpop.f32.mrf.mxu0
    %v114 = vadd.f32 %v77, %v113
    %v115 = vpop.f32.mrf.mxu0
    %v116 = vpop.f32.mrf.mxu0
    %v117 = vpop.f32.mrf.mxu0
    %118 = vdwg.mxu0
    %v119 = vmax.f32 %v114, 0.0
    %v120 = vpack.c.bf16 %v119, %v119
    %v121 = vld [vmem:[%s4] sm:$0x1]
    %v123 = vlaneseq
    %v124 = vshrl.u32 %v123, 7
    %v125 = vsub.s32 0, %v124
    %v126 = vrot.slane %v121, %v125
    %128 = vmatprep.subr.bf16.mxu0 0
    %129 = vmatpush1.bf16.msra.mxu0 %v71
    %130 = vmatprep.subr.bf16.mxu0 0
    %131 = vmatpush1.bf16.msra.mxu0 %v70
    %132 = vmatprep.subr.bf16.mxu0 0
    %133 = vmatpush1.bf16.msra.mxu0 %v69
    %134 = vmatprep.subr.bf16.mxu0 0
    %135 = vmatpush1.bf16.msra.mxu0 %v68
    %136 = vmatprep.subr.bf16.mxu0 0
    %137 = vmatpush1.bf16.msra.mxu0 %v67
    %138 = vmatprep.subr.bf16.mxu0 0
    %139 = vmatpush1.bf16.msra.mxu0 %v66
    %140 = vmatprep.subr.bf16.mxu0 0
    %141 = vmatpush1.bf16.msra.mxu0 %v65
    %142 = vmatprep.subr.bf16.mxu0 0
    %143 = vmatpush1.bf16.msra.mxu0 %v64
    %144 = vmatprep.subr.bf16.mxu0 0
    %145 = vmatpush2.bf16.msra.mxu0 0
    %146 = vmatprep.subr.bf16.mxu0 0
    %147 = vmatpush2.bf16.msra.mxu0 0
    %148 = vmatprep.subr.bf16.mxu0 0
    %149 = vmatpush2.bf16.msra.mxu0 0
    %150 = vmatprep.subr.bf16.mxu0 0
    %151 = vmatpush2.bf16.msra.mxu0 0
    %152 = vmatprep.subr.bf16.mxu0 0
    %153 = vmatpush2.bf16.msra.mxu0 0
    %154 = vmatprep.subr.bf16.mxu0 0
    %155 = vmatpush2.bf16.msra.mxu0 0
    %156 = vmatprep.subr.bf16.mxu0 0
    %157 = vmatpush2.bf16.msra.mxu0 0
    %158 = vmatprep.subr.bf16.mxu0 0
    %159 = vmatpush2.bf16.msra.mxu0 0
    %160 = vmatprep.mubr.bf16.mxu0 0
    %161 = vmatmul.mubr.bf16.gmra.mxu0 %v120
    %v162 = vpop.f32.mrf.mxu0
    %v163 = vadd.f32 %v126, %v162
    %v164 = vpop.f32.mrf.mxu0
    %v165 = vpop.f32.mrf.mxu0
    %v166 = vpop.f32.mrf.mxu0
    %167 = vdwg.mxu0
    %v168 = vtanh.pop %v163
    %v169 = vmax.f32 %v168, 0.0
    %vm170 = vcmask 125952
    %171 = vst.msk [vmem:[#allocation2] sm:$0xf] %vm170, %v169
    // Predicated region
    $region22: #{tpu_custom_call.1} parent=1 // pred_check
      _
    $region23: #{tpu_custom_call.1} parent=1 // pred_check_branch
      %173 = sbr.rel (0) target = $region25
    $region24: #{tpu_custom_call.1} parent=1 // pred_region
      %s175 = ssub.s32 64, 64
      %176 = vsyncadd [#allocation3], %s175
      %s178 = sshll.u32 [#allocation2], 4
      %s179 = int_to_ptr.vmem [resolvable:$true] %s178
      %181 = dma.vmem_to_hbm [thread:$0]  %s179, 64, %s5, [#allocation3]
    $region25: #{tpu_custom_call.1} parent=1 // pred_fallthru
      _
    // Predicated region
    $region26: #{tpu_custom_call.1} parent=1 // pred_check
      _
    $region27: #{tpu_custom_call.1} parent=1 // pred_check_branch
      %183 = sbr.rel (0) target = $region29
    $region28: #{tpu_custom_call.1} parent=1 // pred_region
      %184 = dma.done [#allocation3], 64
    $region29: #{tpu_custom_call.1} parent=1 // pred_fallthru
      _
    %185 = vsyncpa [#allocation3], 1

</llo_original>
